<compile_context>
chip_gen: v5e
topology: v5e:2x2
jax: 0.10.0
libtpu: 0.0.40
codegen_flags: <defaults>
</compile_context>

<pallas_src>
import jax
import jax.numpy as jnp
from jax.experimental import pallas as pl
from jax.experimental.pallas import tpu as pltpu

HIDDEN = 128


def _round_up(x, m):
    return (x + m - 1) // m * m


def qnetwork_kernel(x_ref, w1_ref, b1_ref, w2_ref, b2_ref, w3_ref, b3_ref,
                    out_ref):
    # All math in f32 (matches the PyTorch module; v5e VPU has no bf16 anyway).
    # Layer 1: (TB, S) @ (S, H)
    h1 = jnp.dot(x_ref[...], w1_ref[...], preferred_element_type=jnp.float32)
    h1 = jnp.maximum(h1 + b1_ref[...], 0.0)

    # Layer 2: (TB, H) @ (H, H)
    h2 = jnp.dot(h1, w2_ref[...], preferred_element_type=jnp.float32)
    h2 = jnp.maximum(h2 + b2_ref[...], 0.0)

    # Layer 3: (TB, H) @ (H, A) -- narrow masked store; kernel is not
    # store-slot bound, and this avoids 128-lane f32 writeback inflation.
    q = jnp.dot(h2, w3_ref[...], preferred_element_type=jnp.float32)
    out_ref[...] = (q + b3_ref[...]).astype(out_ref.dtype)


def qnetwork_forward(x, params):
    """x: (B, state_dim) float32. params: dict of w1,b1,w2,b2,w3,b3 (f32)."""
    w1, b1 = params["w1"], params["b1"]
    w2, b2 = params["w2"], params["b2"]
    w3, b3 = params["w3"], params["b3"]

    B, S = x.shape
    A = w3.shape[1]

    # Batch tile selection:
    #  * small batches (act-selection path): one 8-row-aligned tile, no extra
    #    wrapper ops at all.
    #  * replay-sized batches: big tiles (<= 2048 rows) to amortize grid-step
    #    overhead, but at least 2 grid steps so v7x's 2 TensorCores both get
    #    work via the "parallel" batch axis.
    if B <= 512:
        TB = _round_up(B, 8)
    else:
        TB = min(2048, _round_up(-(-B // 2), 256))
    grid = (pl.cdiv(B, TB),)

    out = pl.pallas_call(
        qnetwork_kernel,
        out_shape=jax.ShapeDtypeStruct((B, A), jnp.float32),
        grid=grid,
        in_specs=[
            pl.BlockSpec((TB, S), lambda i: (i, 0)),          # x tile
            pl.BlockSpec((S, HIDDEN), lambda i: (0, 0)),      # w1 (resident)
            pl.BlockSpec((1, HIDDEN), lambda i: (0, 0)),      # b1
            pl.BlockSpec((HIDDEN, HIDDEN), lambda i: (0, 0)),  # w2
            pl.BlockSpec((1, HIDDEN), lambda i: (0, 0)),      # b2
            pl.BlockSpec((HIDDEN, A), lambda i: (0, 0)),      # w3
            pl.BlockSpec((1, A), lambda i: (0, 0)),           # b3
        ],
        out_specs=pl.BlockSpec((TB, A), lambda i: (i, 0)),
        compiler_params=pltpu.CompilerParams(
            dimension_semantics=("parallel",),
            vmem_limit_bytes=32 * 1024 * 1024,
        ),
    )(x, w1, b1, w2, b2, w3, b3)

    return out


def init_params(key, state_dim, action_dim):
    """Deterministic init mimicking nn.Linear (uniform +/- 1/sqrt(fan_in))."""
    def linear(key, fan_in, fan_out):
        kw, kb = jax.random.split(key)
        bound = 1.0 / jnp.sqrt(fan_in)
        w = jax.random.uniform(kw, (fan_in, fan_out), jnp.float32,
                               minval=-bound, maxval=bound)
        b = jax.random.uniform(kb, (1, fan_out), jnp.float32,
                               minval=-bound, maxval=bound)
        return w, b

    k1, k2, k3 = jax.random.split(key, 3)
    w1, b1 = linear(k1, state_dim, HIDDEN)
    w2, b2 = linear(k2, HIDDEN, HIDDEN)
    w3, b3 = linear(k3, HIDDEN, action_dim)
    return {"w1": w1, "b1": b1, "w2": w2, "b2": b2, "w3": w3, "b3": b3}


def qnetwork_ref(x, p):
    """Pure-JAX f32 reference (mirrors the PyTorch module)."""
    h1 = jnp.maximum(jnp.dot(x, p["w1"]) + p["b1"], 0.0)
    h2 = jnp.maximum(jnp.dot(h1, p["w2"]) + p["b2"], 0.0)
    return jnp.dot(h2, p["w3"]) + p["b3"]


if __name__ == "__main__":
    key = jax.random.PRNGKey(0)
    k_x, k_x2, k_p = jax.random.split(key, 3)

    state_dim, action_dim = 16, 4
    params = init_params(k_p, state_dim, action_dim)

    # Small batch (act-selection path): single tile, no padding anywhere.
    batch = 8
    x = jax.random.normal(k_x, (batch, state_dim), jnp.float32)
    out = jax.block_until_ready(qnetwork_forward(x, params))
    ref = qnetwork_ref(x, params)
    assert out.shape == (batch, action_dim)
    assert jnp.allclose(out, ref, atol=1e-2, rtol=1e-2), "small-batch mismatch"

    # Replay-buffer-like batch exercising the multi-step grid and the
    # masked (uneven) final tile.
    batch2 = 600  # forces TB=512, grid of 2 steps, masked tail rows
    x2 = jax.random.normal(k_x2, (batch2, state_dim), jnp.float32)
    out2 = jax.block_until_ready(qnetwork_forward(x2, params))
    ref2 = qnetwork_ref(x2, params)
    assert out2.shape == (batch2, action_dim)
    assert jnp.allclose(out2, ref2, atol=1e-2, rtol=1e-2), "batched mismatch"

    print("KERNEL_OK")
</pallas_src>

<mosaic_0001>
module attributes {stable_mosaic.version = 11 : i64} {
  func.func @qnetwork_kernel(%arg0: i32, %arg1: memref<8x16xf32, #tpu.memory_space<vmem>>, %arg2: memref<16x128xf32, #tpu.memory_space<vmem>>, %arg3: memref<1x128xf32, #tpu.memory_space<vmem>>, %arg4: memref<128x128xf32, #tpu.memory_space<vmem>>, %arg5: memref<1x128xf32, #tpu.memory_space<vmem>>, %arg6: memref<128x4xf32, #tpu.memory_space<vmem>>, %arg7: memref<1x4xf32, #tpu.memory_space<vmem>>, %arg8: memref<8x4xf32, #tpu.memory_space<vmem>>) attributes {dimension_semantics = [#tpu.dimension_semantics<parallel>], iteration_bounds = array<i64: 1>, scalar_prefetch = 0 : i64, scratch_operands = 0 : i64, tpu.core_type = #tpu.core_type<tc>, window_params = [{transform_indices = @transform_0, window_bounds = array<i64: 8, 16>}, {pipeline_mode = #tpu.pipeline_mode<synchronous>, transform_indices = @transform_1, window_bounds = array<i64: 16, 128>}, {pipeline_mode = #tpu.pipeline_mode<synchronous>, transform_indices = @transform_2, window_bounds = array<i64: 1, 128>}, {pipeline_mode = #tpu.pipeline_mode<synchronous>, transform_indices = @transform_3, window_bounds = array<i64: 128, 128>}, {pipeline_mode = #tpu.pipeline_mode<synchronous>, transform_indices = @transform_4, window_bounds = array<i64: 1, 128>}, {pipeline_mode = #tpu.pipeline_mode<synchronous>, transform_indices = @transform_5, window_bounds = array<i64: 128, 4>}, {pipeline_mode = #tpu.pipeline_mode<synchronous>, transform_indices = @transform_6, window_bounds = array<i64: 1, 4>}, {transform_indices = @transform_7, window_bounds = array<i64: 8, 4>}]} {
    %c0 = arith.constant 0 : index
    %c0_0 = arith.constant 0 : index
    %0 = vector.load %arg1[%c0, %c0_0] : memref<8x16xf32, #tpu.memory_space<vmem>>, vector<8x16xf32>
    %c0_1 = arith.constant 0 : index
    %c0_2 = arith.constant 0 : index
    %1 = vector.load %arg2[%c0_1, %c0_2] : memref<16x128xf32, #tpu.memory_space<vmem>>, vector<16x128xf32>
    %cst = arith.constant dense<0.000000e+00> : vector<8x128xf32>
    %2 = tpu.matmul %0, %1, %cst {dimension_numbers = #tpu.dot_dimension_numbers<[1], [0], [0], [1], [0, 0, 1, 1], [], []>} : vector<8x16xf32>, vector<16x128xf32>, vector<8x128xf32> -> vector<8x128xf32>
    %c0_3 = arith.constant 0 : index
    %c0_4 = arith.constant 0 : index
    %3 = vector.load %arg3[%c0_3, %c0_4] : memref<1x128xf32, #tpu.memory_space<vmem>>, vector<1x128xf32>
    %4 = vector.broadcast %3 : vector<1x128xf32> to vector<8x128xf32>
    %5 = arith.addf %2, %4 : vector<8x128xf32>
    %cst_5 = arith.constant 0.000000e+00 : f32
    %6 = vector.broadcast %cst_5 : f32 to vector<8x128xf32>
    %7 = arith.maximumf %5, %6 : vector<8x128xf32>
    %c0_6 = arith.constant 0 : index
    %c0_7 = arith.constant 0 : index
    %8 = vector.load %arg4[%c0_6, %c0_7] : memref<128x128xf32, #tpu.memory_space<vmem>>, vector<128x128xf32>
    %cst_8 = arith.constant dense<0.000000e+00> : vector<8x128xf32>
    %9 = tpu.matmul %7, %8, %cst_8 {dimension_numbers = #tpu.dot_dimension_numbers<[1], [0], [0], [1], [0, 0, 1, 1], [], []>} : vector<8x128xf32>, vector<128x128xf32>, vector<8x128xf32> -> vector<8x128xf32>
    %c0_9 = arith.constant 0 : index
    %c0_10 = arith.constant 0 : index
    %10 = vector.load %arg5[%c0_9, %c0_10] : memref<1x128xf32, #tpu.memory_space<vmem>>, vector<1x128xf32>
    %11 = vector.broadcast %10 : vector<1x128xf32> to vector<8x128xf32>
    %12 = arith.addf %9, %11 : vector<8x128xf32>
    %cst_11 = arith.constant 0.000000e+00 : f32
    %13 = vector.broadcast %cst_11 : f32 to vector<8x128xf32>
    %14 = arith.maximumf %12, %13 : vector<8x128xf32>
    %c0_12 = arith.constant 0 : index
    %c0_13 = arith.constant 0 : index
    %15 = vector.load %arg6[%c0_12, %c0_13] : memref<128x4xf32, #tpu.memory_space<vmem>>, vector<128x4xf32>
    %cst_14 = arith.constant dense<0.000000e+00> : vector<8x4xf32>
    %16 = tpu.matmul %14, %15, %cst_14 {dimension_numbers = #tpu.dot_dimension_numbers<[1], [0], [0], [1], [0, 0, 1, 1], [], []>} : vector<8x128xf32>, vector<128x4xf32>, vector<8x4xf32> -> vector<8x4xf32>
    %c0_15 = arith.constant 0 : index
    %c0_16 = arith.constant 0 : index
    %17 = vector.load %arg7[%c0_15, %c0_16] : memref<1x4xf32, #tpu.memory_space<vmem>>, vector<1x4xf32>
    %18 = vector.broadcast %17 : vector<1x4xf32> to vector<8x4xf32>
    %19 = arith.addf %16, %18 : vector<8x4xf32>
    %c0_17 = arith.constant 0 : index
    %c0_18 = arith.constant 0 : index
    %20 = vector.load %arg8[%c0_17, %c0_18] : memref<8x4xf32, #tpu.memory_space<vmem>>, vector<8x4xf32>
    tpu.vector_store %arg8[%c0_17, %c0_18], %19 {strides = array<i32>} : memref<8x4xf32, #tpu.memory_space<vmem>>, vector<8x4xf32>,
    return
  }
  func.func @transform_0(%arg0: i32) -> (i32, i32) {
    %c0_i32 = arith.constant 0 : i32
    %c0_i32_0 = arith.constant 0 : i32
    return %arg0, %c0_i32 : i32, i32
  }
  func.func @transform_1(%arg0: i32) -> (i32, i32) {
    %c0_i32 = arith.constant 0 : i32
    %c0_i32_0 = arith.constant 0 : i32
    %c0_i32_1 = arith.constant 0 : i32
    return %c0_i32, %c0_i32_0 : i32, i32
  }
  func.func @transform_2(%arg0: i32) -> (i32, i32) {
    %c0_i32 = arith.constant 0 : i32
    %c0_i32_0 = arith.constant 0 : i32
    %c0_i32_1 = arith.constant 0 : i32
    return %c0_i32, %c0_i32_0 : i32, i32
  }
  func.func @transform_3(%arg0: i32) -> (i32, i32) {
    %c0_i32 = arith.constant 0 : i32
    %c0_i32_0 = arith.constant 0 : i32
    %c0_i32_1 = arith.constant 0 : i32
    return %c0_i32, %c0_i32_0 : i32, i32
  }
  func.func @transform_4(%arg0: i32) -> (i32, i32) {
    %c0_i32 = arith.constant 0 : i32
    %c0_i32_0 = arith.constant 0 : i32
    %c0_i32_1 = arith.constant 0 : i32
    return %c0_i32, %c0_i32_0 : i32, i32
  }
  func.func @transform_5(%arg0: i32) -> (i32, i32) {
    %c0_i32 = arith.constant 0 : i32
    %c0_i32_0 = arith.constant 0 : i32
    %c0_i32_1 = arith.constant 0 : i32
    return %c0_i32, %c0_i32_0 : i32, i32
  }
  func.func @transform_6(%arg0: i32) -> (i32, i32) {
    %c0_i32 = arith.constant 0 : i32
    %c0_i32_0 = arith.constant 0 : i32
    %c0_i32_1 = arith.constant 0 : i32
    return %c0_i32, %c0_i32_0 : i32, i32
  }
  func.func @transform_7(%arg0: i32) -> (i32, i32) {
    %c0_i32 = arith.constant 0 : i32
    %c0_i32_0 = arith.constant 0 : i32
    return %arg0, %c0_i32 : i32, i32
  }
}

</mosaic_0001>

<llo_original>
// kernel: tpu_custom_call.1
$region0: #{tpu_custom_call.1}
  #allocation0 [shape = 'u32[]', space=smem, size = 0x4, offset = 0x4, fixed_abs, tag = 'smem constant byte address 0x4 - core index']
  #allocation1 [shape = 'u32[72,128]{1,0:T(1,128)}', space=vmem, size = 0x9000, scoped, tag = 'internal scratch']
  %s0 = inlined_call_operand.hbm [shape: f32[8,16], index: 0, kind: input, shape index: {}]
  %s1 = inlined_call_operand.hbm [shape: f32[16,128], index: 1, kind: input, shape index: {}]
  %s2 = inlined_call_operand.vmem [shape: f32[1,128], index: 2, kind: input, shape index: {}]
  %s3 = inlined_call_operand.vmem [shape: f32[128,128], index: 3, kind: input, shape index: {}]
  %s4 = inlined_call_operand.vmem [shape: f32[1,128], index: 4, kind: input, shape index: {}]
  %s5 = inlined_call_operand.vmem [shape: f32[128,4], index: 5, kind: input, shape index: {}]
  %s6 = inlined_call_operand.vmem [shape: f32[1,4], index: 6, kind: input, shape index: {}]
  %s7 = inlined_call_operand.vmem [shape: f32[8,4], index: 7, kind: output, shape index: {}]
  %s8 = sld [smem:[#allocation0]]
  $region46: #{tpu_custom_call.1} parent=0
    _
  %s10 = ssub.s32 1, %s8
  %s11 = scalar_select 0, %s10, %s8
  $region1: #{tpu_custom_call.1} parent=0
    #allocation2 [shape = 'u8[4096]{0}', space=vmem, size = 0x1000, scoped, tag = 'input window, operand 0, single buffered']
    #allocation3 [shape = 's32[1]{0}', space=sflag, size = 0x4, scoped, tag = 'scoped memory for tpu_custom_call.1']
    #allocation4 [shape = 'u8[8192]{0}', space=vmem, size = 0x2000, scoped, tag = 'input window, operand 1, single buffered']
    #allocation5 [shape = 's32[1]{0}', space=sflag, size = 0x4, scoped, tag = 'scoped memory for tpu_custom_call.1']
    %12 = vsyncpa [#allocation3], 0
    %13 = vsyncpa [#allocation5], 0
    // Predicated region
    $region2: #{tpu_custom_call.1} parent=1 // pred_check
      _
    $region3: #{tpu_custom_call.1} parent=1 // pred_check_branch
      %15 = sbr.rel (0) target = $region5
    $region4: #{tpu_custom_call.1} parent=1 // pred_region
      %17 = vsyncadd [#allocation3], 0
      %s19 = sshll.u32 %s0, 4
      %s20 = int_to_ptr.hbm [resolvable:$true] %s19
      %s21 = sshll.u32 [#allocation2], 4
      %s22 = int_to_ptr.vmem [resolvable:$true] %s21
      %24 = dma.hbm_to_vmem [thread:$0]  %s20, 128, %s22, [#allocation3]
    $region5: #{tpu_custom_call.1} parent=1 // pred_fallthru
      _
    // Predicated region
    $region6: #{tpu_custom_call.1} parent=1 // pred_check
      _
    $region7: #{tpu_custom_call.1} parent=1 // pred_check_branch
      %26 = sbr.rel (0) target = $region9
    $region8: #{tpu_custom_call.1} parent=1 // pred_region
      %28 = vsyncadd [#allocation5], 0
      %s29 = sshll.u32 %s1, 4
      %s30 = int_to_ptr.hbm [resolvable:$true] %s29
      %s31 = sshll.u32 [#allocation4], 4
      %s32 = int_to_ptr.vmem [resolvable:$true] %s31
      %37 = dma.hbm_to_vmem [thread:$0]  %s30, 256, %s32, [#allocation5], 128, 128, 8
    $region9: #{tpu_custom_call.1} parent=1 // pred_fallthru
      _
    // Predicated region
    $region10: #{tpu_custom_call.1} parent=1 // pred_check
      _
    $region11: #{tpu_custom_call.1} parent=1 // pred_check_branch
      %39 = sbr.rel (0) target = $region13
    $region12: #{tpu_custom_call.1} parent=1 // pred_region
      _
    $region13: #{tpu_custom_call.1} parent=1 // pred_fallthru
      _
    // Predicated region
    $region14: #{tpu_custom_call.1} parent=1 // pred_check
      _
    $region15: #{tpu_custom_call.1} parent=1 // pred_check_branch
      %41 = sbr.rel (0) target = $region17
    $region16: #{tpu_custom_call.1} parent=1 // pred_region
      _
    $region17: #{tpu_custom_call.1} parent=1 // pred_fallthru
      _
    // Predicated region
    $region18: #{tpu_custom_call.1} parent=1 // pred_check
      _
    $region19: #{tpu_custom_call.1} parent=1 // pred_check_branch
      %43 = sbr.rel (0) target = $region21
    $region20: #{tpu_custom_call.1} parent=1 // pred_region
      _
    $region21: #{tpu_custom_call.1} parent=1 // pred_fallthru
      _
    // Predicated region
    $region22: #{tpu_custom_call.1} parent=1 // pred_check
      _
    $region23: #{tpu_custom_call.1} parent=1 // pred_check_branch
      %45 = sbr.rel (0) target = $region25
    $region24: #{tpu_custom_call.1} parent=1 // pred_region
      _
    $region25: #{tpu_custom_call.1} parent=1 // pred_fallthru
      _
    // Predicated region
    $region26: #{tpu_custom_call.1} parent=1 // pred_check
      _
    $region27: #{tpu_custom_call.1} parent=1 // pred_check_branch
      %47 = sbr.rel (0) target = $region29
    $region28: #{tpu_custom_call.1} parent=1 // pred_region
      _
    $region29: #{tpu_custom_call.1} parent=1 // pred_fallthru
      _
    // Predicated region
    $region30: #{tpu_custom_call.1} parent=1 // pred_check
      _
    $region31: #{tpu_custom_call.1} parent=1 // pred_check_branch
      %49 = sbr.rel (0) target = $region33
    $region32: #{tpu_custom_call.1} parent=1 // pred_region
      %51 = dma.done [#allocation3], 128
    $region33: #{tpu_custom_call.1} parent=1 // pred_fallthru
      _
    // Predicated region
    $region34: #{tpu_custom_call.1} parent=1 // pred_check
      _
    $region35: #{tpu_custom_call.1} parent=1 // pred_check_branch
      %53 = sbr.rel (0) target = $region37
    $region36: #{tpu_custom_call.1} parent=1 // pred_region
      %55 = dma.done [#allocation5], 256
    $region37: #{tpu_custom_call.1} parent=1 // pred_fallthru
      _
    %v56 = vld [vmem:[#allocation2] sm:$0xff]
    %v57 = vld [vmem:[#allocation4] sm:$0xff]
    %v58 = vld [vmem:[#allocation4 + $0x8] sm:$0xff]
    %v59 = vld [vmem:[%s2] sm:$0x1]
    %v61 = vperm.slane %v59, 0
    %vm63 = vcmask 130048
    %v65 = vsel %vm63, %v56, 0
    %67 = vmatpush.msra.mxu0 0.0
    %68 = vmatpush.msra.mxu0 0.0
    %69 = vmatpush.msra.mxu0 0.0
    %70 = vmatpush.msra.mxu0 0.0
    %71 = vmatpush.msra.mxu0 0.0
    %72 = vmatpush.msra.mxu0 0.0
    %73 = vmatpush.msra.mxu0 0.0
    %74 = vmatpush.msra.mxu0 0.0
    %75 = vmatpush.msra.mxu0 0.0
    %76 = vmatpush.msra.mxu0 0.0
    %77 = vmatpush.msra.mxu0 0.0
    %78 = vmatpush.msra.mxu0 0.0
    %79 = vmatpush.msra.mxu0 0.0
    %80 = vmatpush.msra.mxu0 0.0
    %81 = vmatpush.msra.mxu0 %v58
    %82 = vmatpush.msra.mxu0 %v57
    %83 = vmatmul.f32.gmra.mxu0 %v65
    %v84 = vpop.f32.mrf.mxu0
    %v85 = vadd.f32 %v61, %v84
    %86 = vdwg.mxu0
    %v87 = vmax.f32 %v85, 0.0
    %v88 = vld [vmem:[%s3] sm:$0xff]
    %v89 = vld [vmem:[%s3 + $0x8] sm:$0xff]
    %v90 = vld [vmem:[%s3 + $0x10] sm:$0xff]
    %v91 = vld [vmem:[%s3 + $0x18] sm:$0xff]
    %v92 = vld [vmem:[%s3 + $0x20] sm:$0xff]
    %v93 = vld [vmem:[%s3 + $0x28] sm:$0xff]
    %v94 = vld [vmem:[%s3 + $0x30] sm:$0xff]
    %v95 = vld [vmem:[%s3 + $0x38] sm:$0xff]
    %v96 = vld [vmem:[%s3 + $0x40] sm:$0xff]
    %v97 = vld [vmem:[%s3 + $0x48] sm:$0xff]
    %v98 = vld [vmem:[%s3 + $0x50] sm:$0xff]
    %v99 = vld [vmem:[%s3 + $0x58] sm:$0xff]
    %v100 = vld [vmem:[%s3 + $0x60] sm:$0xff]
    %v101 = vld [vmem:[%s3 + $0x68] sm:$0xff]
    %v102 = vld [vmem:[%s3 + $0x70] sm:$0xff]
    %v103 = vld [vmem:[%s3 + $0x78] sm:$0xff]
    %v104 = vld [vmem:[%s4] sm:$0x1]
    %v106 = vperm.slane %v104, 0
    %108 = vmatpush.msra.mxu0 %v103
    %109 = vmatpush.msra.mxu0 %v102
    %110 = vmatpush.msra.mxu0 %v101
    %111 = vmatpush.msra.mxu0 %v100
    %112 = vmatpush.msra.mxu0 %v99
    %113 = vmatpush.msra.mxu0 %v98
    %114 = vmatpush.msra.mxu0 %v97
    %115 = vmatpush.msra.mxu0 %v96
    %116 = vmatpush.msra.mxu0 %v95
    %117 = vmatpush.msra.mxu0 %v94
    %118 = vmatpush.msra.mxu0 %v93
    %119 = vmatpush.msra.mxu0 %v92
    %120 = vmatpush.msra.mxu0 %v91
    %121 = vmatpush.msra.mxu0 %v90
    %122 = vmatpush.msra.mxu0 %v89
    %123 = vmatpush.msra.mxu0 %v88
    %124 = vmatmul.f32.gmra.mxu0 %v87
    %v125 = vpop.f32.mrf.mxu0
    %v126 = vadd.f32 %v106, %v125
    %127 = vdwg.mxu0
    %v128 = vmax.f32 %v126, 0.0
    %v129 = vld [vmem:[%s5] sm:$0xff]
    %v130 = vld [vmem:[%s5 + $0x8] sm:$0xff]
    %v131 = vld [vmem:[%s5 + $0x10] sm:$0xff]
    %v132 = vld [vmem:[%s5 + $0x18] sm:$0xff]
    %v133 = vld [vmem:[%s5 + $0x20] sm:$0xff]
    %v134 = vld [vmem:[%s5 + $0x28] sm:$0xff]
    %v135 = vld [vmem:[%s5 + $0x30] sm:$0xff]
    %v136 = vld [vmem:[%s5 + $0x38] sm:$0xff]
    %v137 = vld [vmem:[%s5 + $0x40] sm:$0xff]
    %v138 = vld [vmem:[%s5 + $0x48] sm:$0xff]
    %v139 = vld [vmem:[%s5 + $0x50] sm:$0xff]
    %v140 = vld [vmem:[%s5 + $0x58] sm:$0xff]
    %v141 = vld [vmem:[%s5 + $0x60] sm:$0xff]
    %v142 = vld [vmem:[%s5 + $0x68] sm:$0xff]
    %v143 = vld [vmem:[%s5 + $0x70] sm:$0xff]
    %v144 = vld [vmem:[%s5 + $0x78] sm:$0xff]
    %v145 = vld [vmem:[%s6] sm:$0x1]
    %v147 = vperm.slane %v145, 0
    %149 = vmatpush.msra.mxu0 %v144
    %150 = vmatpush.msra.mxu0 %v143
    %151 = vmatpush.msra.mxu0 %v142
    %152 = vmatpush.msra.mxu0 %v141
    %153 = vmatpush.msra.mxu0 %v140
    %154 = vmatpush.msra.mxu0 %v139
    %155 = vmatpush.msra.mxu0 %v138
    %156 = vmatpush.msra.mxu0 %v137
    %157 = vmatpush.msra.mxu0 %v136
    %158 = vmatpush.msra.mxu0 %v135
    %159 = vmatpush.msra.mxu0 %v134
    %160 = vmatpush.msra.mxu0 %v133
    %161 = vmatpush.msra.mxu0 %v132
    %162 = vmatpush.msra.mxu0 %v131
    %163 = vmatpush.msra.mxu0 %v130
    %164 = vmatpush.msra.mxu0 %v129
    %165 = vmatmul.f32.gmra.mxu0 %v128
    %v166 = vpop.f32.mrf.mxu0
    %v167 = vadd.f32 %v147, %v166
    %168 = vdwg.mxu0
    %vm169 = vcmask 31744
    %170 = vst.msk [vmem:[%s7] sm:$0xff] %vm169, %v167
    // Predicated region
    $region38: #{tpu_custom_call.1} parent=1 // pred_check
      _
    $region39: #{tpu_custom_call.1} parent=1 // pred_check_branch
      %172 = sbr.rel (0) target = $region41
    $region40: #{tpu_custom_call.1} parent=1 // pred_region
      _
    $region41: #{tpu_custom_call.1} parent=1 // pred_fallthru
      _
    // Predicated region
    $region42: #{tpu_custom_call.1} parent=1 // pred_check
      _
    $region43: #{tpu_custom_call.1} parent=1 // pred_check_branch
      %174 = sbr.rel (0) target = $region45
    $region44: #{tpu_custom_call.1} parent=1 // pred_region
      _
    $region45: #{tpu_custom_call.1} parent=1 // pred_fallthru
      _
    %175 = vsyncpa [#allocation3], 1
    %176 = vsyncpa [#allocation5], 1

</llo_original>
